<compile_context>
chip_gen: v7x
topology: tpu7x:2x2x1
jax: 0.10.0
libtpu: 0.0.40
codegen_flags: <defaults>
</compile_context>

<pallas_src>
import functools
import math

import jax
import jax.numpy as jnp
from jax.experimental import pallas as pl
from jax.experimental.pallas import tpu as pltpu


_LANE_CANDIDATES = (4096, 2048, 1024, 512, 256, 128)  # lane-dense last dims
_MIN_GRID_STEPS = 8  # >= ~4 steps per TC on v7x: pipeline hides in+out DMA


# ----------------------------------------------------------------------------
# Hardware profile: per-generation block target / VMEM limit.
# ----------------------------------------------------------------------------
@functools.lru_cache(maxsize=1)
def _hw_profile():
    """Returns (target_block_bytes, vmem_limit_bytes)."""
    kind = ""
    try:
        kind = jax.devices()[0].device_kind.lower()
    except Exception:  # pragma: no cover - no device / CPU fallback
        pass
    if "v7" in kind or "tpu7" in kind or "7x" in kind:
        # v7x: ~3.2 TB/s HBM per TC, 64 MiB VMEM per TC.
        return 8 << 20, 48 << 20
    if "v5e" in kind or "v5 lite" in kind or "v5lite" in kind:
        # v5e: ~0.8 TB/s; 2 MiB blocks already >85-90% amortized.
        return 2 << 20, 32 << 20
    # v6e / default: ~1.4 TB/s.
    return 4 << 20, 32 << 20


# ----------------------------------------------------------------------------
# Elementwise-ness verification (jaxpr allow-list).  A lambda that passes this
# check commutes with any reshape/tiling, so running it per VMEM block is safe.
# ----------------------------------------------------------------------------
_ELEMENTWISE_PRIMS = frozenset({
    "add", "sub", "mul", "div", "rem", "pow", "integer_pow", "max", "min",
    "neg", "sign", "abs", "floor", "ceil", "round", "nextafter",
    "exp", "exp2", "expm1", "log", "log1p", "sqrt", "rsqrt", "cbrt", "square",
    "logistic", "tanh", "tan", "sin", "cos", "asin", "acos", "atan", "atan2",
    "sinh", "cosh", "asinh", "acosh", "atanh", "erf", "erfc", "erf_inv",
    "is_finite", "not", "and", "or", "xor",
    "shift_left", "shift_right_logical", "shift_right_arithmetic",
    "eq", "ne", "lt", "le", "gt", "ge", "select_n", "clamp",
    "convert_element_type", "bitcast_convert_type", "reduce_precision",
    "copy", "real", "imag", "conj", "population_count", "clz",
})
# Call-like primitives: recurse into their sub-jaxprs.
_CALL_PRIMS = frozenset({
    "pjit", "jit", "closed_call", "core_call", "named_call", "xla_call",
    "custom_jvp_call", "custom_vjp_call",
    "custom_jvp_call_jaxpr", "custom_vjp_call_jaxpr",
    "remat", "remat2", "checkpoint",
})
# Shape ops that are only safe when splatting a scalar (e.g. literal 2.0).
_SPLAT_PRIMS = frozenset({
    "broadcast_in_dim", "broadcast", "reshape", "squeeze", "expand_dims",
})


def _scalar_sized(shape):
    return math.prod(shape) <= 1


def _aval_ok(aval, full_shape):
    shape = tuple(getattr(aval, "shape", ()))
    return _scalar_sized(shape) or shape == tuple(full_shape)


def _jaxpr_elementwise(closed_or_open, full_shape):
    jaxpr = getattr(closed_or_open, "jaxpr", closed_or_open)
    for c in getattr(closed_or_open, "consts", ()):
        if not _scalar_sized(tuple(getattr(c, "shape", ()))):
            return False  # captured non-scalar tensor -> positional dependence
    for eqn in jaxpr.eqns:
        # Every value must be either scalar-sized or exactly the input shape.
        for v in list(eqn.invars) + list(eqn.outvars):
            if not _aval_ok(getattr(v, "aval", None), full_shape):
                return False
        name = eqn.primitive.name
        if name in _CALL_PRIMS:
            subs = [p for p in eqn.params.values()
                    if hasattr(p, "eqns")
                    or (hasattr(p, "jaxpr") and hasattr(p, "consts"))]
            if not subs or not all(_jaxpr_elementwise(s, full_shape) for s in subs):
                return False
        elif name in _ELEMENTWISE_PRIMS:
            continue
        elif name in _SPLAT_PRIMS:
            for v in eqn.invars:
                if not _scalar_sized(tuple(getattr(getattr(v, "aval", None),
                                                   "shape", ()))):
                    return False
        else:
            return False  # reductions, gathers, transposes, control flow, ...
    return True


def _is_elementwise(fn, shape, dtype):
    try:
        closed = jax.make_jaxpr(fn)(jax.ShapeDtypeStruct(shape, dtype))
    except (TypeError, ValueError):
        try:
            closed = jax.make_jaxpr(fn)(jnp.zeros(shape, dtype))
        except Exception:
            return False
    except Exception:
        return False
    try:
        return _jaxpr_elementwise(closed, shape)
    except Exception:
        return False


# ----------------------------------------------------------------------------
# Tiling helpers.
# ----------------------------------------------------------------------------
def _sublane_multiple(*dtypes):
    # Packed sublane granularity: 4-byte -> 8, 2-byte -> 16, 1-byte -> 32.
    return max(max(8, 32 // max(1, jnp.dtype(d).itemsize)) for d in dtypes)


def _pick_lane(n, sub_mult, require_divides):
    """Widest lane-dense last dim whose row count gives full sublane blocks."""
    best_any = None
    for lane in _LANE_CANDIDATES:
        if require_divides and n % lane != 0:
            continue
        rows = n // lane
        if rows >= sub_mult:
            return lane
        if rows >= 1 and best_any is None:
            best_any = lane  # tiny tensor: widest usable lane, full-dim block
    return best_any


def _pick_block_rows(rows, lane, max_itemsize, sub_mult, target_bytes):
    """Rows per block targeting `target_bytes` per operand, while keeping the
    grid at least _MIN_GRID_STEPS long (DMA/compute overlap + v7x dual-TC)."""
    if rows <= sub_mult:
        return rows  # single full-extent block (tiny tensor)
    target = max(sub_mult, target_bytes // (lane * max_itemsize))
    by_grid = pl.cdiv(rows, _MIN_GRID_STEPS)
    block = max(sub_mult, (min(target, by_grid) // sub_mult) * sub_mult)
    return min(block, rows)


# ----------------------------------------------------------------------------
# The kernel and its launcher.
# ----------------------------------------------------------------------------
def _lambda_kernel(x_ref, o_ref, *, lambda_func):
    # Elementwise lambda on one VMEM tile (VPU/EUP); full-width store.  On v5e
    # Mosaic auto-inserts f32 casts for bf16 transcendentals; the op remains
    # DMA-bound so we keep the lambda's own compute dtype (exact semantics).
    o_ref[...] = lambda_func(x_ref[...]).astype(o_ref.dtype)


def _run_tiled(lambda_func, x2d, out_dtype, block_rows, lane, vmem_limit):
    rows = x2d.shape[0]
    n = int(rows * lane)
    in_bytes = n * jnp.dtype(x2d.dtype).itemsize
    out_bytes = n * jnp.dtype(out_dtype).itemsize
    # Alias output onto input when dtypes match: avoids a second full-size HBM
    # buffer when the input is dead after the call (typical inside a jitted
    # model); XLA inserts a protective copy otherwise, so semantics are safe.
    alias = {0: 0} if jnp.dtype(x2d.dtype) == jnp.dtype(out_dtype) else {}
    return pl.pallas_call(
        functools.partial(_lambda_kernel, lambda_func=lambda_func),
        out_shape=jax.ShapeDtypeStruct((rows, lane), out_dtype),
        grid=(pl.cdiv(rows, block_rows),),  # last block may be partial
        in_specs=[pl.BlockSpec((block_rows, lane), lambda i: (i, 0))],
        out_specs=pl.BlockSpec((block_rows, lane), lambda i: (i, 0)),
        input_output_aliases=alias,
        cost_estimate=pl.CostEstimate(
            flops=n, transcendentals=0, bytes_accessed=in_bytes + out_bytes),
        compiler_params=pltpu.CompilerParams(
            # "parallel" lets v7x shard the 1-D grid across its two
            # TensorCores; it is a harmless no-op on single-TC v5e/v6e.
            dimension_semantics=("parallel",),
            vmem_limit_bytes=vmem_limit,
        ),
    )(x2d)


# ----------------------------------------------------------------------------
# Public wrapper: mirrors LambdaLayer.
# ----------------------------------------------------------------------------
def make_lambda_layer(lambda_func):
    """Mirror LambdaLayer.__init__: accept a callable or a string to eval."""
    if isinstance(lambda_func, str):
        lambda_func = eval(lambda_func)  # same semantics as the PyTorch module

    def forward(x):
        if x.size == 0:
            return lambda_func(x)

        # Gate 1: single-array, shape-preserving output.
        try:
            out_aval = jax.eval_shape(
                lambda_func, jax.ShapeDtypeStruct(x.shape, x.dtype))
        except Exception:
            return lambda_func(x)
        if (not isinstance(out_aval, jax.ShapeDtypeStruct)
                or tuple(out_aval.shape) != tuple(x.shape)):
            return lambda_func(x)

        # Gate 2: verified elementwise (jaxpr allow-list).
        if not _is_elementwise(lambda_func, x.shape, x.dtype):
            # TODO(synk): shape-preserving but non-elementwise lambdas
            # (softmax, mean-subtraction, flips, broadcasts against captured
            # tensors) have no generic Pallas lowering; apply directly.
            return lambda_func(x)

        out_dtype = out_aval.dtype
        orig_shape = x.shape
        n = int(x.size)
        target_bytes, vmem_limit = _hw_profile()
        max_itemsize = max(jnp.dtype(x.dtype).itemsize,
                           jnp.dtype(out_dtype).itemsize)
        sub_mult = _sublane_multiple(x.dtype, out_dtype)

        # --- Fast path: in-place reshape to a lane-dense slab (no pad/copy).
        lane = _pick_lane(n, sub_mult, require_divides=True)
        if lane is not None:
            rows = n // lane
            block_rows = _pick_block_rows(rows, lane, max_itemsize, sub_mult,
                                          target_bytes)
            out2d = _run_tiled(lambda_func, x.reshape(rows, lane), out_dtype,
                               block_rows, lane, vmem_limit)
            return out2d.reshape(orig_shape)

        # --- Ragged path (n not a multiple of 128): Pallas on the lane-aligned
        # body in place, tiny (< lane) tail in plain JAX.  No whole-tensor
        # pad+slice and no lambda applied to zero padding.
        if n < 128 * sub_mult:
            return lambda_func(x)  # tiny tensor: kernel launch not worth it
        body_lane = _pick_lane(n, sub_mult, require_divides=False)
        if body_lane is None:
            return lambda_func(x)
        flat = x.reshape(-1)
        rows = n // body_lane
        n_body = rows * body_lane
        block_rows = _pick_block_rows(rows, body_lane, max_itemsize, sub_mult,
                                      target_bytes)
        body = _run_tiled(lambda_func, flat[:n_body].reshape(rows, body_lane),
                          out_dtype, block_rows, body_lane, vmem_limit)
        tail = lambda_func(flat[n_body:]).astype(out_dtype)
        return jnp.concatenate([body.reshape(-1), tail]).reshape(orig_shape)

    return forward


if __name__ == "__main__":
    # Same construction pattern as the PyTorch module: lambda given as a string.
    lambda_str = "lambda x: x * 2 + 1"
    layer = make_lambda_layer(lambda_str)

    key = jax.random.PRNGKey(0)
    x = jax.random.normal(key, (2, 4, 16, 16), dtype=jnp.float32)  # NCHW-style
    y = jax.block_until_ready(layer(x))
    ref = eval(lambda_str)(x)
    assert y.shape == ref.shape and y.dtype == ref.dtype
    assert jnp.allclose(y, ref, atol=1e-6, rtol=1e-6)

    # Callable lambda with dtype change: multi-step grid, no aliasing.
    layer2 = make_lambda_layer(lambda z: jax.nn.gelu(z).astype(jnp.bfloat16))
    x2 = jax.random.normal(jax.random.PRNGKey(1), (2, 8, 128, 128),
                           dtype=jnp.float32)
    y2 = jax.block_until_ready(layer2(x2))
    ref2 = jax.nn.gelu(x2).astype(jnp.bfloat16)
    assert y2.shape == ref2.shape and y2.dtype == ref2.dtype
    assert jnp.allclose(y2.astype(jnp.float32), ref2.astype(jnp.float32),
                        atol=2e-2, rtol=2e-2)

    # Rows not divisible by block_rows: partial final block on the fast path.
    x3 = jax.random.normal(jax.random.PRNGKey(2), (2, 4, 40, 128),
                           dtype=jnp.float32)
    y3 = jax.block_until_ready(layer(x3))
    ref3 = eval(lambda_str)(x3)
    assert y3.shape == ref3.shape and jnp.allclose(y3, ref3, atol=1e-6, rtol=1e-6)

    # Size not a multiple of 128: Pallas body + plain-JAX tail, no padding.
    x4 = jax.random.normal(jax.random.PRNGKey(3), (7, 300), dtype=jnp.float32)
    y4 = jax.block_until_ready(layer(x4))
    ref4 = eval(lambda_str)(x4)
    assert y4.shape == ref4.shape and jnp.allclose(y4, ref4, atol=1e-6, rtol=1e-6)

    # Tiny ragged tensor: plain-JAX path, exact semantics.
    x5 = jax.random.normal(jax.random.PRNGKey(4), (3, 5, 7), dtype=jnp.float32)
    y5 = jax.block_until_ready(layer(x5))
    assert jnp.allclose(y5, eval(lambda_str)(x5), atol=1e-6, rtol=1e-6)

    # Shape-preserving but NON-elementwise lambda: must be rejected by the
    # jaxpr gate and fall back to plain JAX with identical results.
    layer6 = make_lambda_layer(lambda t: jax.nn.softmax(t, axis=-1))
    x6 = jax.random.normal(jax.random.PRNGKey(5), (2, 8, 32), dtype=jnp.float32)
    y6 = jax.block_until_ready(layer6(x6))
    assert jnp.allclose(y6, jax.nn.softmax(x6, axis=-1), atol=1e-6, rtol=1e-6)

    print("KERNEL_OK")
</pallas_src>

<mosaic_0001>
module attributes {stable_mosaic.version = 11 : i64} {
  func.func @_lambda_kernel(%arg0: i32, %arg1: memref<8x256xf32, #tpu.memory_space<vmem>>, %arg2: memref<8x256xf32, #tpu.memory_space<vmem>>) attributes {dimension_semantics = [#tpu.dimension_semantics<parallel>], iteration_bounds = array<i64: 1>, scalar_prefetch = 0 : i64, scratch_operands = 0 : i64, tpu.core_type = #tpu.core_type<tc>, window_params = [{transform_indices = @transform_0, window_bounds = array<i64: 8, 256>}, {transform_indices = @transform_1, window_bounds = array<i64: 8, 256>}]} {
    %c0 = arith.constant 0 : index
    %c0_0 = arith.constant 0 : index
    %0 = vector.load %arg1[%c0, %c0_0] : memref<8x256xf32, #tpu.memory_space<vmem>>, vector<8x256xf32>
    %cst = arith.constant 2.000000e+00 : f32
    %1 = vector.broadcast %cst : f32 to vector<8x256xf32>
    %2 = arith.mulf %0, %1 : vector<8x256xf32>
    %cst_1 = arith.constant 1.000000e+00 : f32
    %3 = vector.broadcast %cst_1 : f32 to vector<8x256xf32>
    %4 = arith.addf %2, %3 : vector<8x256xf32>
    %c0_2 = arith.constant 0 : index
    %c0_3 = arith.constant 0 : index
    %5 = vector.load %arg2[%c0_2, %c0_3] : memref<8x256xf32, #tpu.memory_space<vmem>>, vector<8x256xf32>
    tpu.vector_store %arg2[%c0_2, %c0_3], %4 {strides = array<i32>} : memref<8x256xf32, #tpu.memory_space<vmem>>, vector<8x256xf32>,
    return
  }
  func.func @transform_0(%arg0: i32) -> (i32, i32) {
    %c0_i32 = arith.constant 0 : i32
    %c0_i32_0 = arith.constant 0 : i32
    return %arg0, %c0_i32 : i32, i32
  }
  func.func @transform_1(%arg0: i32) -> (i32, i32) {
    %c0_i32 = arith.constant 0 : i32
    %c0_i32_0 = arith.constant 0 : i32
    return %arg0, %c0_i32 : i32, i32
  }
}

</mosaic_0001>

<llo_original>
// kernel: tpu_custom_call.1
$region0: #{tpu_custom_call.1}
  #allocation0 [shape = 'u32[]', space=smem, size = 0x4, offset = 0x4, fixed_abs, tag = 'smem constant byte address 0x4 - core index']
  #allocation1 [shape = 'u32[144,128]{1,0:T(1,128)}', space=vmem, size = 0x12000, scoped, tag = 'internal scratch']
  %s0 = inlined_call_operand.hbm [shape: f32[8,256], index: 0, kind: input, shape index: {}, may-alias: {0,1}]
  %s1 = inlined_call_operand.hbm [shape: f32[8,256], index: 1, kind: output, shape index: {}, may-alias: {0,1}]
  %s2 = sld [smem:[#allocation0]]
  $region18: #{tpu_custom_call.1} parent=0
    _
  %s4 = ssub.s32 1, %s2
  %s5 = scalar_select 0, %s4, %s2
  $region1: #{tpu_custom_call.1} parent=0
    #allocation2 [shape = 'u8[8192]{0}', space=vmem, size = 0x2000, scoped, tag = 'input window, operand 0, single buffered']
    #allocation3 [shape = 's32[1]{0}', space=sflag, size = 0x4, scoped, tag = 'scoped memory for tpu_custom_call.1']
    #allocation4 [shape = 's32[1]{0}', space=sflag, size = 0x4, scoped, tag = 'scoped memory for tpu_custom_call.1']
    #allocation5 [shape = 'u8[8192]{0}', space=vmem, size = 0x2000, scoped, tag = 'output window, operand 0, single buffered']
    %6 = vsyncpa [#allocation3], 0
    %7 = vsyncpa [#allocation4], 0
    // Predicated region
    $region2: #{tpu_custom_call.1} parent=1 // pred_check
      _
    $region3: #{tpu_custom_call.1} parent=1 // pred_check_branch
      %9 = sbr.rel (0) target = $region5
    $region4: #{tpu_custom_call.1} parent=1 // pred_region
      %s11 = ssub.s32 256, 256
      %12 = vsyncadd [#allocation3], %s11
      %s14 = sshll.u32 [#allocation2], 4
      %s15 = int_to_ptr.vmem [resolvable:$true] %s14
      %17 = dma.hbm_to_vmem [thread:$0]  %s0, 256, %s15, [#allocation3]
    $region5: #{tpu_custom_call.1} parent=1 // pred_fallthru
      _
    // Predicated region
    $region6: #{tpu_custom_call.1} parent=1 // pred_check
      _
    $region7: #{tpu_custom_call.1} parent=1 // pred_check_branch
      %19 = sbr.rel (0) target = $region9
    $region8: #{tpu_custom_call.1} parent=1 // pred_region
      %20 = dma.done [#allocation3], 256
    $region9: #{tpu_custom_call.1} parent=1 // pred_fallthru
      _
    %v21 = vld [vmem:[#allocation2] sm:$0xff]
    %v22 = vld [vmem:[#allocation2 + $0x8] sm:$0xff]
    %v23 = vmul.f32 %v21, 2.0
    %v24 = vmul.f32 %v22, 2.0
    %v25 = vadd.f32 %v23, 1.0
    %v26 = vadd.f32 %v24, 1.0
    %27 = vst [vmem:[#allocation5] sm:$0xff] %v25
    %28 = vst [vmem:[#allocation5 + $0x8] sm:$0xff] %v26
    // Predicated region
    $region10: #{tpu_custom_call.1} parent=1 // pred_check
      _
    $region11: #{tpu_custom_call.1} parent=1 // pred_check_branch
      %30 = sbr.rel (0) target = $region13
    $region12: #{tpu_custom_call.1} parent=1 // pred_region
      %s32 = ssub.s32 256, 256
      %33 = vsyncadd [#allocation4], %s32
      %s35 = sshll.u32 [#allocation5], 4
      %s36 = int_to_ptr.vmem [resolvable:$true] %s35
      %38 = dma.vmem_to_hbm [thread:$0]  %s36, 256, %s1, [#allocation4]
    $region13: #{tpu_custom_call.1} parent=1 // pred_fallthru
      _
    // Predicated region
    $region14: #{tpu_custom_call.1} parent=1 // pred_check
      _
    $region15: #{tpu_custom_call.1} parent=1 // pred_check_branch
      %40 = sbr.rel (0) target = $region17
    $region16: #{tpu_custom_call.1} parent=1 // pred_region
      %41 = dma.done [#allocation4], 256
    $region17: #{tpu_custom_call.1} parent=1 // pred_fallthru
      _
    %42 = vsyncpa [#allocation3], 1
    %43 = vsyncpa [#allocation4], 1

</llo_original>
